<compile_context>
chip_gen: v6e
topology: v6e:2x2x1
jax: 0.10.0
libtpu: 0.0.40
codegen_flags: <defaults>
</compile_context>

<pallas_src>
import functools

import jax
import jax.numpy as jnp
from jax import lax
from jax.experimental import pallas as pl
from jax.experimental.pallas import tpu as pltpu


def _certify_kernel(sigma, r_ref, spd_ref, lab_ref, out_ref):
    # Batch rows on sublanes, classes on lanes.
    r = r_ref[...].astype(jnp.float32)        # (TB, C)
    spd = spd_ref[...].astype(jnp.float32)    # (TB, 4) = [s11, s12, s21, s22]
    lab = lab_ref[...]                        # (TB, 1) int32

    tb, c = r.shape
    col = lax.broadcasted_iota(jnp.int32, (tb, c), 1)

    # Single pass over the tile: top-1 score, first-occurrence argmax (matches
    # torch.topk tie-breaking) and top-2 score.  The class reductions run along
    # the lane axis (XLU slot), the compares/selects on the VPU.
    m1 = jnp.max(r, axis=1, keepdims=True)                                   # (TB, 1)
    idx1 = jnp.min(jnp.where(r == m1, col, c), axis=1, keepdims=True)        # (TB, 1)
    m2 = jnp.max(jnp.where(col == idx1, -jnp.inf, r), axis=1, keepdims=True)  # (TB, 1)

    correct = idx1 == lab                                                    # (TB, 1)

    s11 = spd[:, 0:1]
    s12 = spd[:, 1:2]
    s22 = spd[:, 3:4]
    inv_denom = lax.rsqrt(s11 + s22 + 2.0 * jnp.abs(s12))                    # EUP rsqrt
    loss2 = jnp.float32(sigma) * (m1 - m2) * inv_denom                       # >= 0

    # Radius only; `correct` is recovered in the wrapper as radius >= 0.
    out_ref[...] = jnp.where(correct, loss2, jnp.float32(-1.0))


def _round_up(x, m):
    return ((x + m - 1) // m) * m


def _pick_tile(B, C):
    """Batch rows per grid step.

    VMEM cost per batch row for one pipeline buffer set (every operand's minor dim
    pads to 128 lanes in VMEM): logits 4*roundup(C,128) bytes plus 4*128 bytes each
    for spd / label / out.  Budget ~10 MiB per buffer set -> ~20 MiB double-buffered
    plus in-kernel temporaries stays well inside v7x's 64 MiB VMEM (v5e/v6e: 128 MiB),
    while tiles remain large enough to amortize the ~0.35 us per-step overhead.
    """
    per_row = 4 * _round_up(C, 128) + 3 * 4 * 128
    budget = 10 << 20
    tb = max(8, (budget // per_row) // 8 * 8)
    if B > 16:
        # Keep >= 2 grid steps: DMA/compute overlap + 2-TensorCore sharding on v7x.
        tb = min(tb, _round_up(-(-B // 2), 8))
    else:
        tb = min(tb, _round_up(B, 8))
    return tb


def certify_gaussian(inputR, inputSPD, label, sigma):
    B, C = inputR.shape
    TB = _pick_tile(B, C)
    grid = (pl.cdiv(B, TB),)

    # Zero-copy relayouts only: [B,2,2] -> [B,4] and [B] -> [B,1].
    spd4 = inputSPD.reshape(B, 4)
    lab = label.astype(jnp.int32).reshape(B, 1)

    kernel = functools.partial(_certify_kernel, float(sigma))

    out = pl.pallas_call(
        kernel,
        out_shape=jax.ShapeDtypeStruct((B, 1), jnp.float32),
        grid=grid,
        in_specs=[
            pl.BlockSpec((TB, C), lambda i: (i, 0)),   # logits (bf16 or f32 accepted)
            pl.BlockSpec((TB, 4), lambda i: (i, 0)),   # SPD entries
            pl.BlockSpec((TB, 1), lambda i: (i, 0)),   # labels
        ],
        out_specs=pl.BlockSpec((TB, 1), lambda i: (i, 0)),
        compiler_params=pltpu.CompilerParams(
            dimension_semantics=("parallel",),
            vmem_limit_bytes=48 * 1024 * 1024,
        ),
        cost_estimate=pl.CostEstimate(
            flops=8 * B * C,
            transcendentals=B,
            bytes_accessed=4 * B * (C + 4 + 1 + 1),
        ),
    )(inputR, spd4, lab)

    radius = out[:, 0]
    # loss2 >= 0 always (m1 >= m2, SPD denominator > 0); incorrect rows are -1.
    correct = radius >= 0.0
    return correct, radius


def _reference(inputR, inputSPD, label, sigma):
    # Pure-JAX reference mirroring the PyTorch forward.
    top2_score, top2_idx = lax.top_k(inputR, 2)
    correct = top2_idx[:, 0] == label
    s11 = inputSPD[:, 0, 0]
    s22 = inputSPD[:, 1, 1]
    s12 = inputSPD[:, 0, 1]
    loss2 = sigma * (top2_score[:, 0] - top2_score[:, 1]) / jnp.sqrt(
        s11 + s22 + 2.0 * jnp.abs(s12)
    )
    radius = jnp.where(correct, loss2, -1.0)
    return correct, radius


if __name__ == "__main__":
    key = jax.random.PRNGKey(0)
    k1, k2, k3 = jax.random.split(key, 3)

    B, C, K = 48, 10, 2          # batch, num classes, SPD size
    sigma = 0.25

    inputR = jax.random.normal(k1, (B, C), dtype=jnp.float32)
    A = jax.random.normal(k2, (B, K, K), dtype=jnp.float32)
    inputSPD = jnp.einsum("bij,bkj->bik", A, A) + 0.1 * jnp.eye(K, dtype=jnp.float32)
    label = jax.random.randint(k3, (B,), 0, C, dtype=jnp.int32)

    correct, radius = certify_gaussian(inputR, inputSPD, label, sigma)
    jax.block_until_ready((correct, radius))

    ref_correct, ref_radius = _reference(inputR, inputSPD, label, sigma)
    assert bool(jnp.all(correct == ref_correct))
    assert bool(jnp.allclose(radius, ref_radius, rtol=1e-5, atol=1e-5))

    print("KERNEL_OK")
</pallas_src>

<mosaic_0001>
module attributes {stable_mosaic.version = 11 : i64} {
  func.func @_certify_kernel(%arg0: i32, %arg1: memref<24x10xf32, #tpu.memory_space<vmem>>, %arg2: memref<24x4xf32, #tpu.memory_space<vmem>>, %arg3: memref<24x1xi32, #tpu.memory_space<vmem>>, %arg4: memref<24x1xf32, #tpu.memory_space<vmem>>) attributes {dimension_semantics = [#tpu.dimension_semantics<parallel>], iteration_bounds = array<i64: 2>, scalar_prefetch = 0 : i64, scratch_operands = 0 : i64, tpu.core_type = #tpu.core_type<tc>, window_params = [{transform_indices = @transform_0, window_bounds = array<i64: 24, 10>}, {transform_indices = @transform_1, window_bounds = array<i64: 24, 4>}, {transform_indices = @transform_2, window_bounds = array<i64: 24, 1>}, {transform_indices = @transform_3, window_bounds = array<i64: 24, 1>}]} {
    %c0 = arith.constant 0 : index
    %c0_0 = arith.constant 0 : index
    %0 = vector.load %arg1[%c0, %c0_0] : memref<24x10xf32, #tpu.memory_space<vmem>>, vector<24x10xf32>
    %c0_1 = arith.constant 0 : index
    %c0_2 = arith.constant 0 : index
    %1 = vector.load %arg2[%c0_1, %c0_2] : memref<24x4xf32, #tpu.memory_space<vmem>>, vector<24x4xf32>
    %c0_3 = arith.constant 0 : index
    %c0_4 = arith.constant 0 : index
    %2 = vector.load %arg3[%c0_3, %c0_4] : memref<24x1xi32, #tpu.memory_space<vmem>>, vector<24x1xi32>
    %3 = tpu.iota {dimensions = array<i32: 1>} : vector<24x10xi32>
    %cst = arith.constant dense<0xFF800000> : vector<24xf32>
    %4 = vector.multi_reduction <maximumf>, %0, %cst [1] : vector<24x10xf32> to vector<24xf32>
    %5 = vector.shape_cast %4 : vector<24xf32> to vector<24x1xf32>
    %6 = vector.broadcast %5 : vector<24x1xf32> to vector<24x10xf32>
    %7 = arith.cmpf oeq, %0, %6 : vector<24x10xf32>
    %c10_i32 = arith.constant 10 : i32
    %8 = vector.broadcast %c10_i32 : i32 to vector<24x10xi32>
    %9 = arith.select %7, %3, %8 : vector<24x10xi1>, vector<24x10xi32>
    %cst_5 = arith.constant dense<2147483647> : vector<24xi32>
    %10 = vector.multi_reduction <minsi>, %9, %cst_5 [1] : vector<24x10xi32> to vector<24xi32>
    %11 = vector.shape_cast %10 : vector<24xi32> to vector<24x1xi32>
    %12 = vector.broadcast %11 : vector<24x1xi32> to vector<24x10xi32>
    %13 = arith.cmpi eq, %3, %12 : vector<24x10xi32>
    %cst_6 = arith.constant 0xFF800000 : f32
    %14 = vector.broadcast %cst_6 : f32 to vector<24x10xf32>
    %15 = arith.select %13, %14, %0 : vector<24x10xi1>, vector<24x10xf32>
    %cst_7 = arith.constant dense<0xFF800000> : vector<24xf32>
    %16 = vector.multi_reduction <maximumf>, %15, %cst_7 [1] : vector<24x10xf32> to vector<24xf32>
    %17 = vector.shape_cast %16 : vector<24xf32> to vector<24x1xf32>
    %18 = arith.cmpi eq, %11, %2 : vector<24x1xi32>
    %19 = vector.extract_strided_slice %1 {offsets = [0, 0], sizes = [24, 1], strides = [1, 1]} : vector<24x4xf32> to vector<24x1xf32>
    %20 = vector.extract_strided_slice %1 {offsets = [0, 1], sizes = [24, 1], strides = [1, 1]} : vector<24x4xf32> to vector<24x1xf32>
    %21 = vector.extract_strided_slice %1 {offsets = [0, 3], sizes = [24, 1], strides = [1, 1]} : vector<24x4xf32> to vector<24x1xf32>
    %22 = arith.addf %19, %21 : vector<24x1xf32>
    %23 = math.absf %20 : vector<24x1xf32>
    %cst_8 = arith.constant 2.000000e+00 : f32
    %24 = vector.broadcast %cst_8 : f32 to vector<24x1xf32>
    %25 = arith.mulf %24, %23 : vector<24x1xf32>
    %26 = arith.addf %22, %25 : vector<24x1xf32>
    %27 = math.rsqrt %26 : vector<24x1xf32>
    %28 = arith.subf %5, %17 : vector<24x1xf32>
    %cst_9 = arith.constant 2.500000e-01 : f32
    %29 = vector.broadcast %cst_9 : f32 to vector<24x1xf32>
    %30 = arith.mulf %29, %28 : vector<24x1xf32>
    %31 = arith.mulf %30, %27 : vector<24x1xf32>
    %cst_10 = arith.constant -1.000000e+00 : f32
    %32 = vector.broadcast %cst_10 : f32 to vector<24x1xf32>
    %33 = arith.select %18, %31, %32 : vector<24x1xi1>, vector<24x1xf32>
    %c0_11 = arith.constant 0 : index
    %c0_12 = arith.constant 0 : index
    %34 = vector.load %arg4[%c0_11, %c0_12] : memref<24x1xf32, #tpu.memory_space<vmem>>, vector<24x1xf32>
    tpu.vector_store %arg4[%c0_11, %c0_12], %33 {strides = array<i32>} : memref<24x1xf32, #tpu.memory_space<vmem>>, vector<24x1xf32>,
    return
  }
  func.func @transform_0(%arg0: i32) -> (i32, i32) {
    %c0_i32 = arith.constant 0 : i32
    %c0_i32_0 = arith.constant 0 : i32
    return %arg0, %c0_i32 : i32, i32
  }
  func.func @transform_1(%arg0: i32) -> (i32, i32) {
    %c0_i32 = arith.constant 0 : i32
    %c0_i32_0 = arith.constant 0 : i32
    return %arg0, %c0_i32 : i32, i32
  }
  func.func @transform_2(%arg0: i32) -> (i32, i32) {
    %c0_i32 = arith.constant 0 : i32
    %c0_i32_0 = arith.constant 0 : i32
    return %arg0, %c0_i32 : i32, i32
  }
  func.func @transform_3(%arg0: i32) -> (i32, i32) {
    %c0_i32 = arith.constant 0 : i32
    %c0_i32_0 = arith.constant 0 : i32
    return %arg0, %c0_i32 : i32, i32
  }
}

</mosaic_0001>

<llo_original>
// kernel: tpu_custom_call.1
$region0: #{tpu_custom_call.1}
  #allocation0 [shape = 'u32[]', space=smem, size = 0x4, offset = 0x4, fixed_abs, tag = 'smem constant byte address 0x4 - core index']
  #allocation1 [shape = 'u32[144,128]{1,0:T(1,128)}', space=vmem, size = 0x12000, scoped, tag = 'internal scratch']
  %s0 = inlined_call_operand.vmem [shape: f32[48,10], index: 0, kind: input, shape index: {}]
  %s1 = inlined_call_operand.vmem [shape: f32[48,4], index: 1, kind: input, shape index: {}]
  %s2 = inlined_call_operand.vmem [shape: s32[48,1], index: 2, kind: input, shape index: {}]
  %s3 = inlined_call_operand.vmem [shape: f32[48,1], index: 3, kind: output, shape index: {}]
  %s4 = sld [smem:[#allocation0]]
  $region45: #{tpu_custom_call.1} parent=0
    _
  %s6 = ssub.s32 1, %s4
  %s7 = scalar_select 0, %s6, %s4
  loop: start=0, step=1, limit=4
  $region2: #{tpu_custom_call.1} parent=0 // loop_pre_header
    _
  $region3: #{tpu_custom_call.1} parent=0 // loop_header
    %s9 = sphi 0, %s13
    %p10 = scmp.ge.s32.totalorder %s9, 4
    %s19 = sphi 0, %s21
    %s22 = sphi 0, %s19
    %s23 = sphi 0, %s22
    %s39 = sphi 0, %s23
    %s45 = sphi 0, %s47
    %s48 = sphi 0, %s45
    %s49 = sphi 0, %s48
    %s65 = sphi 0, %s49
    %s71 = sphi 0, %s73
    %s74 = sphi 0, %s71
    %s75 = sphi 0, %s74
    %s91 = sphi 0, %s75
    %s97 = sphi 0, %s99
    %s100 = sphi 0, %s97
    %s101 = sphi 0, %s100
    %s117 = sphi 0, %s101
  $region4: #{tpu_custom_call.1} parent=0 // loop_header_branch
    %12 = sbr.rel (%p10) target = $region8
  $region5: #{tpu_custom_call.1} parent=0 // loop_body
    %s14 = ssub.s32 %s9, 1
    %s15 = ssub.s32 %s9, 2
    %s16 = sadd.s32 %s9, 1
    %s17 = ssub.s32 %s9, %s16
    %p18 = scmp.eq.s32.totalorder %s17, 0
    %s20 = sadd.s32 %s19, 1
    %s21 = scalar_select %p18, %s19, %s20
    %p24 = pneg %p18
    %p25 = scmp.eq.s32.totalorder %s9, 1
    %p26 = por %p24, %p25
    %p27 = scmp.ne.s32.totalorder %s19, %s22
    %p28 = scmp.eq.s32.totalorder %s9, 0
    %p29 = por %p27, %p28
    %p30 = scmp.ne.s32.totalorder %s19, %s22
    %p31 = scmp.eq.s32.totalorder %s14, 1
    %p32 = por %p30, %p31
    %p33 = scmp.ne.s32.totalorder %s22, %s23
    %p34 = scmp.eq.s32.totalorder %s14, 0
    %p35 = por %p33, %p34
    %p36 = scmp.ne.s32.totalorder %s22, %s23
    %p37 = scmp.eq.s32.totalorder %s15, 1
    %p38 = por %p36, %p37
    %p40 = scmp.ne.s32.totalorder %s23, %s39
    %p41 = scmp.eq.s32.totalorder %s15, 0
    %p42 = por %p40, %p41
    %s43 = ssub.s32 %s9, %s16
    %p44 = scmp.eq.s32.totalorder %s43, 0
    %s46 = sadd.s32 %s45, 1
    %s47 = scalar_select %p44, %s45, %s46
    %p50 = pneg %p44
    %p51 = scmp.eq.s32.totalorder %s9, 1
    %p52 = por %p50, %p51
    %p53 = scmp.ne.s32.totalorder %s45, %s48
    %p54 = scmp.eq.s32.totalorder %s9, 0
    %p55 = por %p53, %p54
    %p56 = scmp.ne.s32.totalorder %s45, %s48
    %p57 = scmp.eq.s32.totalorder %s14, 1
    %p58 = por %p56, %p57
    %p59 = scmp.ne.s32.totalorder %s48, %s49
    %p60 = scmp.eq.s32.totalorder %s14, 0
    %p61 = por %p59, %p60
    %p62 = scmp.ne.s32.totalorder %s48, %s49
    %p63 = scmp.eq.s32.totalorder %s15, 1
    %p64 = por %p62, %p63
    %p66 = scmp.ne.s32.totalorder %s49, %s65
    %p67 = scmp.eq.s32.totalorder %s15, 0
    %p68 = por %p66, %p67
    %s69 = ssub.s32 %s9, %s16
    %p70 = scmp.eq.s32.totalorder %s69, 0
    %s72 = sadd.s32 %s71, 1
    %s73 = scalar_select %p70, %s71, %s72
    %p76 = pneg %p70
    %p77 = scmp.eq.s32.totalorder %s9, 1
    %p78 = por %p76, %p77
    %p79 = scmp.ne.s32.totalorder %s71, %s74
    %p80 = scmp.eq.s32.totalorder %s9, 0
    %p81 = por %p79, %p80
    %p82 = scmp.ne.s32.totalorder %s71, %s74
    %p83 = scmp.eq.s32.totalorder %s14, 1
    %p84 = por %p82, %p83
    %p85 = scmp.ne.s32.totalorder %s74, %s75
    %p86 = scmp.eq.s32.totalorder %s14, 0
    %p87 = por %p85, %p86
    %p88 = scmp.ne.s32.totalorder %s74, %s75
    %p89 = scmp.eq.s32.totalorder %s15, 1
    %p90 = por %p88, %p89
    %p92 = scmp.ne.s32.totalorder %s75, %s91
    %p93 = scmp.eq.s32.totalorder %s15, 0
    %p94 = por %p92, %p93
    %s95 = ssub.s32 %s9, %s16
    %p96 = scmp.eq.s32.totalorder %s95, 0
    %s98 = sadd.s32 %s97, 1
    %s99 = scalar_select %p96, %s97, %s98
    %p102 = pneg %p96
    %p103 = scmp.eq.s32.totalorder %s9, 1
    %p104 = por %p102, %p103
    %p105 = scmp.ne.s32.totalorder %s97, %s100
    %p106 = scmp.eq.s32.totalorder %s9, 0
    %p107 = por %p105, %p106
    %p108 = scmp.ne.s32.totalorder %s97, %s100
    %p109 = scmp.eq.s32.totalorder %s14, 1
    %p110 = por %p108, %p109
    %p111 = scmp.ne.s32.totalorder %s100, %s101
    %p112 = scmp.eq.s32.totalorder %s14, 0
    %p113 = por %p111, %p112
    %p114 = scmp.ne.s32.totalorder %s100, %s101
    %p115 = scmp.eq.s32.totalorder %s15, 1
    %p116 = por %p114, %p115
    %p118 = scmp.ne.s32.totalorder %s101, %s117
    %p119 = scmp.eq.s32.totalorder %s15, 0
    %p120 = por %p118, %p119
    %p121 = scmp.le.s32.totalorder 1, %s9
    %p122 = scmp.lt.s32.totalorder %s9, 3
    %p123 = pnand %p121, %p122
    %p124 = pneg %p123
    // Predicated region
    $region9: #{tpu_custom_call.1} parent=5 // pred_check
      _
    $region10: #{tpu_custom_call.1} parent=5 // pred_check_branch
      %126 = sbr.rel (%p123) target = $region12
    $region11: #{tpu_custom_call.1} parent=5 // pred_region
      %s127 = ssub.s32 %s9, 1
    $region12: #{tpu_custom_call.1} parent=5 // pred_fallthru
      _
    %p128 = scmp.lt.s32.totalorder %s9, 2
    // Predicated region
    $region13: #{tpu_custom_call.1} parent=5 // pred_check
      %p129 = pneg %p128
    $region14: #{tpu_custom_call.1} parent=5 // pred_check_branch
      %131 = sbr.rel (%p129) target = $region16
    $region15: #{tpu_custom_call.1} parent=5 // pred_region
      // Predicated region
      $region17: #{tpu_custom_call.1} parent=15 // pred_check
        %p132 = pneg %p29
      $region18: #{tpu_custom_call.1} parent=15 // pred_check_branch
        %134 = sbr.rel (%p132) target = $region20
      $region19: #{tpu_custom_call.1} parent=15 // pred_region
        %s135 = smul.u32 3, %s9
        %p136 = scmp.lt.s32.totalorder %s135, 5
        %s137 = scalar_select %p136, %s135, 5
        %s138 = smul.addr %s137, 8
        %s139 = scalar_lea.vmem %s0, %s138
        %s140 = smul.u32 3, %s9
      $region20: #{tpu_custom_call.1} parent=15 // pred_fallthru
        _
      // Predicated region
      $region21: #{tpu_custom_call.1} parent=15 // pred_check
        %p141 = pneg %p55
      $region22: #{tpu_custom_call.1} parent=15 // pred_check_branch
        %143 = sbr.rel (%p141) target = $region24
      $region23: #{tpu_custom_call.1} parent=15 // pred_region
        %s144 = smul.u32 3, %s9
        %p145 = scmp.lt.s32.totalorder %s144, 5
        %s146 = scalar_select %p145, %s144, 5
        %s147 = smul.addr %s146, 8
        %s148 = scalar_lea.vmem %s1, %s147
        %s149 = smul.u32 3, %s9
      $region24: #{tpu_custom_call.1} parent=15 // pred_fallthru
        _
      // Predicated region
      $region25: #{tpu_custom_call.1} parent=15 // pred_check
        %p150 = pneg %p81
      $region26: #{tpu_custom_call.1} parent=15 // pred_check_branch
        %152 = sbr.rel (%p150) target = $region28
      $region27: #{tpu_custom_call.1} parent=15 // pred_region
        %s153 = smul.u32 3, %s9
        %p154 = scmp.lt.s32.totalorder %s153, 5
        %s155 = scalar_select %p154, %s153, 5
        %s156 = smul.addr %s155, 8
        %s157 = scalar_lea.vmem %s2, %s156
        %s158 = smul.u32 3, %s9
      $region28: #{tpu_custom_call.1} parent=15 // pred_fallthru
        _
    $region16: #{tpu_custom_call.1} parent=5 // pred_fallthru
      _
    %p159 = scmp.le.s32.totalorder 1, %s9
    %p160 = scmp.lt.s32.totalorder %s9, 3
    %p161 = pnand %p159, %p160
    %p162 = pneg %p161
    // Predicated region
    $region29: #{tpu_custom_call.1} parent=5 // pred_check
      _
    $region30: #{tpu_custom_call.1} parent=5 // pred_check_branch
      %164 = sbr.rel (%p161) target = $region32
    $region31: #{tpu_custom_call.1} parent=5 // pred_region
      %s165 = ssub.s32 %s9, 1
      %s166 = smul.u32 3, %s14
      %p167 = scmp.lt.s32.totalorder %s166, 5
      %s168 = scalar_select %p167, %s166, 5
      %s169 = smul.addr %s168, 8
      %s170 = scalar_lea.vmem %s0, %s169
      %p171 = pneg %p35
      %p172 = pneg %p32
      %s173 = smul.u32 3, %s14
      %p174 = scmp.lt.s32.totalorder %s173, 5
      %s175 = scalar_select %p174, %s173, 5
      %s176 = smul.addr %s175, 8
      %s177 = scalar_lea.vmem %s1, %s176
      %p178 = pneg %p61
      %p179 = pneg %p58
      %s180 = smul.u32 3, %s14
      %p181 = scmp.lt.s32.totalorder %s180, 5
      %s182 = scalar_select %p181, %s180, 5
      %s183 = smul.addr %s182, 8
      %s184 = scalar_lea.vmem %s2, %s183
      %p185 = pneg %p87
      %p186 = pneg %p84
      %p187 = pneg %p113
      %p188 = pneg %p110
      %s189 = smul.u32 3, %s14
      %p190 = scmp.lt.s32.totalorder %s189, 5
      %s191 = scalar_select %p190, %s189, 5
      %s192 = smul.addr %s191, 8
      %s193 = scalar_lea.vmem %s3, %s192
      %s194 = smul.u32 3, %s14
      %p195 = scmp.lt.s32.totalorder %s194, 5
      %s196 = scalar_select %p195, %s194, 5
      %s197 = smul.addr %s196, 8
      %s198 = scalar_lea.vmem %s0, %s197
      %s199 = smul.u32 3, %s14
      %s200 = smul.u32 3, %s14
      %p201 = scmp.lt.s32.totalorder %s200, 5
      %s202 = scalar_select %p201, %s200, 5
      %s203 = smul.addr %s202, 8
      %s204 = scalar_lea.vmem %s1, %s203
      %s205 = smul.u32 3, %s14
      %s206 = smul.u32 3, %s14
      %p207 = scmp.lt.s32.totalorder %s206, 5
      %s208 = scalar_select %p207, %s206, 5
      %s209 = smul.addr %s208, 8
      %s210 = scalar_lea.vmem %s2, %s209
      %s211 = smul.u32 3, %s14
      %s212 = smul.u32 3, %s14
      %p213 = scmp.lt.s32.totalorder %s212, 5
      %s214 = scalar_select %p213, %s212, 5
      %s215 = smul.addr %s214, 8
      %s216 = scalar_lea.vmem %s3, %s215
      %s217 = smul.u32 3, %s14
      %v218 = vld [vmem:[%s198] sm:$0xff]
      %v219 = vld [vmem:[%s198 + $0x8] sm:$0xff]
      %v220 = vld [vmem:[%s198 + $0x10] sm:$0xff]
      %v221 = vld [vmem:[%s204] sm:$0xff]
      %v222 = vld [vmem:[%s204 + $0x8] sm:$0xff]
      %v223 = vld [vmem:[%s204 + $0x10] sm:$0xff]
      %v224 = vld [vmem:[%s210] sm:$0xff]
      %v225 = vld [vmem:[%s210 + $0x8] sm:$0xff]
      %v226 = vld [vmem:[%s210 + $0x10] sm:$0xff]
      %v227 = vlaneseq
      %v228 = vand.u32 %v227, 127
      %vm229 = vcmask 80896
      %v230 = vsel %vm229, %v218, -inf
      %231 = vmax.xlane.f32.xlu0 %v230
      %v232 = vpop.xlane.xlu0 %231
      %v233 = vsel %vm229, %v219, -inf
      %234 = vmax.xlane.f32.xlu0 %v233
      %v235 = vpop.xlane.xlu0 %234
      %v236 = vsel %vm229, %v220, -inf
      %237 = vmax.xlane.f32.xlu0 %v236
      %v238 = vpop.xlane.xlu0 %237
      %vm239 = vcmp.eq.f32.partialorder %v218, %v232
      %vm240 = vcmp.eq.f32.partialorder %v219, %v235
      %vm241 = vcmp.eq.f32.partialorder %v220, %v238
      %v242 = vsel %vm239, %v228, 10
      %v243 = vsel %vm240, %v228, 10
      %v244 = vsel %vm241, %v228, 10
      %v245 = vsel %vm229, %v242, 2147483647
      %v246 = vand.u32 %v245, 65535
      %v247 = vshra.s32 %v245, 16
      %v248 = vcvt.s32.f32 %v246
      %v249 = vcvt.s32.f32 %v247
      %250 = vmin.xlane.f32.xlu0 %v249
      %v251 = vpop.xlane.xlu0 %250
      %vm252 = vcmp.eq.f32.partialorder %v249, %v251
      %v253 = vsel %vm252, %v248, inf
      %254 = vmin.xlane.f32.xlu0 %v253
      %v255 = vpop.xlane.xlu0 %254
      %v256 = vcvt.f32.s32 %v255
      %v257 = vcvt.f32.s32 %v251
      %v258 = vshll.u32 %v257, 16
      %v259 = vadd.s32 %v258, %v256
      %v260 = vsel %vm229, %v243, 2147483647
      %v261 = vand.u32 %v260, 65535
      %v262 = vshra.s32 %v260, 16
      %v263 = vcvt.s32.f32 %v261
      %v264 = vcvt.s32.f32 %v262
      %265 = vmin.xlane.f32.xlu0 %v264
      %v266 = vpop.xlane.xlu0 %265
      %vm267 = vcmp.eq.f32.partialorder %v264, %v266
      %v268 = vsel %vm267, %v263, inf
      %269 = vmin.xlane.f32.xlu0 %v268
      %v270 = vpop.xlane.xlu0 %269
      %v271 = vcvt.f32.s32 %v270
      %v272 = vcvt.f32.s32 %v266
      %v273 = vshll.u32 %v272, 16
      %v274 = vadd.s32 %v273, %v271
      %v275 = vsel %vm229, %v244, 2147483647
      %v276 = vand.u32 %v275, 65535
      %v277 = vshra.s32 %v275, 16
      %v278 = vcvt.s32.f32 %v276
      %v279 = vcvt.s32.f32 %v277
      %280 = vmin.xlane.f32.xlu0 %v279
      %v281 = vpop.xlane.xlu0 %280
      %vm282 = vcmp.eq.f32.partialorder %v279, %v281
      %v283 = vsel %vm282, %v278, inf
      %284 = vmin.xlane.f32.xlu0 %v283
      %v285 = vpop.xlane.xlu0 %284
      %v286 = vcvt.f32.s32 %v285
      %v287 = vcvt.f32.s32 %v281
      %v288 = vshll.u32 %v287, 16
      %v289 = vadd.s32 %v288, %v286
      %vm290 = vcmp.eq.s32.totalorder %v228, %v259
      %vm291 = vcmp.eq.s32.totalorder %v228, %v274
      %vm292 = vcmp.eq.s32.totalorder %v228, %v289
      %v293 = vsel %vm290, -inf, %v218
      %v294 = vsel %vm291, -inf, %v219
      %v295 = vsel %vm292, -inf, %v220
      %v296 = vsel %vm229, %v293, -inf
      %297 = vmax.xlane.f32.xlu0 %v296
      %v298 = vpop.xlane.xlu0 %297
      %v299 = vsel %vm229, %v294, -inf
      %300 = vmax.xlane.f32.xlu0 %v299
      %v301 = vpop.xlane.xlu0 %300
      %v302 = vsel %vm229, %v295, -inf
      %303 = vmax.xlane.f32.xlu0 %v302
      %v304 = vpop.xlane.xlu0 %303
      %vm305 = vcmp.eq.s32.totalorder %v259, %v224
      %vm306 = vcmp.eq.s32.totalorder %v274, %v225
      %vm307 = vcmp.eq.s32.totalorder %v289, %v226
      %311 = vrot.lane.b32.xlu0 %v221, 125
      %v312 = vpop.permute.xlu0 %311
      %313 = vrot.lane.b32.xlu0 %v222, 125
      %v314 = vpop.permute.xlu0 %313
      %315 = vrot.lane.b32.xlu0 %v223, 125
      %v316 = vpop.permute.xlu0 %315
      %v320 = vadd.f32 %v221, %v312
      %v321 = vadd.f32 %v222, %v314
      %v322 = vadd.f32 %v223, %v316
      %v323 = vand.u32 2147483647, %v221
      %v324 = vand.u32 2147483647, %v222
      %v325 = vand.u32 2147483647, %v223
      %v326 = vmul.f32 %v323, 2.0
      %v327 = vmul.f32 %v324, 2.0
      %v328 = vmul.f32 %v325, 2.0
      %332 = vrot.lane.b32.xlu0 %v326, 127
      %v333 = vpop.permute.xlu0 %332
      %334 = vrot.lane.b32.xlu0 %v327, 127
      %v335 = vpop.permute.xlu0 %334
      %336 = vrot.lane.b32.xlu0 %v328, 127
      %v337 = vpop.permute.xlu0 %336
      %v341 = vadd.f32 %v320, %v333
      %v342 = vadd.f32 %v321, %v335
      %v343 = vadd.f32 %v322, %v337
      %v344 = vrsqrt.pop %v341
      %v345 = vrsqrt.pop %v342
      %v346 = vrsqrt.pop %v343
      %v347 = vsub.f32 %v232, %v298
      %v348 = vsub.f32 %v235, %v301
      %v349 = vsub.f32 %v238, %v304
      %v350 = vmul.f32 %v347, 0.25
      %v351 = vmul.f32 %v348, 0.25
      %v352 = vmul.f32 %v349, 0.25
      %v353 = vmul.f32 %v350, %v344
      %v354 = vmul.f32 %v351, %v345
      %v355 = vmul.f32 %v352, %v346
      %v356 = vsel %vm305, %v353, -1.0
      %v357 = vsel %vm306, %v354, -1.0
      %v358 = vsel %vm307, %v355, -1.0
      %vm359 = vcmask 7168
      %360 = vst.msk [vmem:[%s216] sm:$0xff] %vm359, %v356
      %361 = vst.msk [vmem:[%s216 + $0x8] sm:$0xff] %vm359, %v357
      %362 = vst.msk [vmem:[%s216 + $0x10] sm:$0xff] %vm359, %v358
      %s363 = smul.u32 3, %s14
      %p364 = scmp.lt.s32.totalorder %s363, 5
      %s365 = scalar_select %p364, %s363, 5
      %s366 = smul.addr %s365, 8
      %s367 = scalar_lea.vmem %s3, %s366
      // Predicated region
      $region33: #{tpu_custom_call.1} parent=31 // pred_check
        %p368 = pneg %p110
      $region34: #{tpu_custom_call.1} parent=31 // pred_check_branch
        %370 = sbr.rel (%p368) target = $region36
      $region35: #{tpu_custom_call.1} parent=31 // pred_region
        %s371 = smul.u32 3, %s14
      $region36: #{tpu_custom_call.1} parent=31 // pred_fallthru
        _
    $region32: #{tpu_custom_call.1} parent=5 // pred_fallthru
      _
    %p372 = scmp.le.s32.totalorder 2, %s9
    // Predicated region
    $region37: #{tpu_custom_call.1} parent=5 // pred_check
      %p373 = pneg %p372
    $region38: #{tpu_custom_call.1} parent=5 // pred_check_branch
      %375 = sbr.rel (%p373) target = $region40
    $region39: #{tpu_custom_call.1} parent=5 // pred_region
      %s376 = ssub.s32 %s9, 2
      // Predicated region
      $region41: #{tpu_custom_call.1} parent=39 // pred_check
        %p377 = pneg %p116
      $region42: #{tpu_custom_call.1} parent=39 // pred_check_branch
        %379 = sbr.rel (%p377) target = $region44
      $region43: #{tpu_custom_call.1} parent=39 // pred_region
        %s380 = smul.u32 3, %s15
        %p381 = scmp.lt.s32.totalorder %s380, 5
        %s382 = scalar_select %p381, %s380, 5
        %s383 = smul.addr %s382, 8
        %s384 = scalar_lea.vmem %s3, %s383
      $region44: #{tpu_custom_call.1} parent=39 // pred_fallthru
        _
    $region40: #{tpu_custom_call.1} parent=5 // pred_fallthru
      _
  $region6: #{tpu_custom_call.1} parent=0 // loop_footer
    %s13 = sadd.s32 1, %s9
  $region7: #{tpu_custom_call.1} parent=0 // loop_footer_branch
    %8 = sbr.rel target = $region3
  $region8: #{tpu_custom_call.1} parent=0 // loop_exit
    _

</llo_original>
